<compile_context>
chip_gen: v7x
topology: tpu7x:2x2x1
jax: 0.10.0
libtpu: 0.0.40
codegen_flags: <defaults>
</compile_context>

<pallas_src>
import functools

import jax
import jax.numpy as jnp
from jax.experimental import pallas as pl
from jax.experimental.pallas import tpu as pltpu

_LANE = 128


def _sublane_multiple(dtype) -> int:
    # f32 -> 8 sublanes, bf16 -> 16, int8/fp8 -> 32 (dtype-aware alignment).
    return max(8, 32 // jnp.dtype(dtype).itemsize)


def _pick_tile(C, HW):
    """Largest multiple-of-128 spatial tile that divides HW (prefer tiles whose
    packed output rows are a multiple of 8); fall back to the whole slab."""
    divs = [t for t in range(2048, 127, -128) if HW % t == 0]
    for t in divs:
        if (t * C) % (8 * _LANE) == 0:
            return t
    return divs[0] if divs else HW


def _packed_ok(C, HW, t_hw):
    """Can the output be emitted as a lane-dense (rows, 128) slab?"""
    if (t_hw * C) % _LANE != 0 or (HW * C) % _LANE != 0:
        return False
    rows = (t_hw * C) // _LANE
    return rows % 8 == 0 or HW == t_hw


def _exchange_kernel(x_ref, o_ref, *, C, pad):
    """One (C, t_hw) input tile -> rearranged output tile.

    o_ref is either (t_hw, C)          (plain layout)            or
                    (t_hw*C//128, 128) (lane-dense packed layout);
    both are row-major views of the same '(h w) c' data.
    """
    x = x_ref[...]                                          # (C, t_hw)
    if pad:                                                 # sublane-align the transpose input
        x = jnp.concatenate(
            [x, jnp.zeros((pad, x.shape[1]), dtype=x.dtype)], axis=0)
    xt = jnp.transpose(x, (1, 0))                           # (t_hw, C[+pad])  -- XLU
    if pad:
        xt = xt[:, :C]                                      # drop pad columns
    # Packed path: relayout to full-lane rows so the store is an unmasked vst
    # and the output DMA is dense.  Plain path: this reshape is a no-op.
    o_ref[...] = xt.reshape(o_ref.shape)


def _build_call(B, C, HW, t_hw, dtype, packed, pad):
    n_s = HW // t_hw
    kernel = functools.partial(_exchange_kernel, C=C, pad=pad)
    in_spec = pl.BlockSpec((None, C, t_hw), lambda b, s: (b, 0, s))
    if packed:
        rows = (t_hw * C) // _LANE
        out_shape = jax.ShapeDtypeStruct((B, (HW * C) // _LANE, _LANE), dtype)
        out_spec = pl.BlockSpec((None, rows, _LANE), lambda b, s: (b, s, 0))
    else:
        out_shape = jax.ShapeDtypeStruct((B, HW, C), dtype)
        out_spec = pl.BlockSpec((None, t_hw, C), lambda b, s: (b, s, 0))
    itemsize = jnp.dtype(dtype).itemsize
    return pl.pallas_call(
        kernel,
        out_shape=out_shape,
        grid=(B, n_s),
        in_specs=[in_spec],
        out_specs=out_spec,
        compiler_params=pltpu.CompilerParams(
            dimension_semantics=("parallel", "parallel")),
        cost_estimate=pl.CostEstimate(
            flops=0, transcendentals=0,
            bytes_accessed=2 * B * C * HW * itemsize),
    )


@functools.lru_cache(maxsize=None)
def _select_variant(dtype_name, C, t_hw, packed_feasible):
    """One-time probe (per dtype/C/tile): pick the fastest kernel variant this
    Mosaic toolchain can lower, verified bit-exact on a single dummy tile.
    Preference order: packed+no-pad > packed+pad > plain+no-pad > plain+pad."""
    dtype = jnp.dtype(dtype_name)
    pad = (-C) % _sublane_multiple(dtype)
    variants = []
    for packed in (True, False):
        if packed and not packed_feasible:
            continue
        variants.append((packed, 0))
        if pad:
            variants.append((packed, pad))
    dummy = (jnp.arange(C * t_hw, dtype=jnp.float32)
             .astype(dtype).reshape(1, C, t_hw))
    want = jnp.swapaxes(dummy, 1, 2)                        # (1, t_hw, C) reference
    for packed, p in variants:
        try:
            got = _build_call(1, C, t_hw, t_hw, dtype, packed, p)(dummy)
            got = got.reshape(want.shape)
            if bool(jnp.all(got == want)):
                return packed, p
        except Exception:
            continue
    return False, pad                                       # known-good fallback


def exchange1(x):
    """Exchange1.forward: (B, C, H, W) -> (B, H*W, C)."""
    B, C, H, W = x.shape
    HW = H * W
    t_hw = _pick_tile(C, HW)
    packed_feasible = _packed_ok(C, HW, t_hw)
    packed, pad = _select_variant(jnp.dtype(x.dtype).name, C, t_hw,
                                  packed_feasible)
    # Free contiguous reshape: lane-dense (C, HW) slab per batch element.
    x2 = x.reshape(B, C, HW)
    out = _build_call(B, C, HW, t_hw, x.dtype, packed, pad)(x2)
    # Free contiguous reshape back: packed (B, HW*C/128, 128) -> (B, HW, C)
    # (no-op for the plain layout).
    return out.reshape(B, HW, C)


if __name__ == "__main__":
    key = jax.random.PRNGKey(0)
    B, C, H, W = 2, 4, 16, 16
    x = jax.random.normal(key, (B, C, H, W), jnp.float32)

    out = jax.jit(exchange1)(x)
    out = jax.block_until_ready(out)

    # Reference: rearrange(x, 'b c h w -> b (h w) c')
    ref = jnp.transpose(x, (0, 2, 3, 1)).reshape(B, H * W, C)
    assert out.shape == (B, H * W, C), out.shape
    assert out.dtype == x.dtype
    assert bool(jnp.all(out == ref))
    print("KERNEL_OK")
</pallas_src>

<mosaic_0001>
module attributes {stable_mosaic.version = 11 : i64} {
  func.func @_exchange_kernel(%arg0: i32, %arg1: i32, %arg2: memref<1x4x256xf32, #tpu.memory_space<vmem>>, %arg3: memref<1x256x4xf32, #tpu.memory_space<vmem>>) attributes {dimension_semantics = [#tpu.dimension_semantics<parallel>, #tpu.dimension_semantics<parallel>], iteration_bounds = array<i64: 2, 1>, scalar_prefetch = 0 : i64, scratch_operands = 0 : i64, tpu.core_type = #tpu.core_type<tc>, window_params = [{transform_indices = @transform_0, window_bounds = array<i64: 1, 4, 256>}, {transform_indices = @transform_1, window_bounds = array<i64: 1, 256, 4>}]} {
    %c0 = arith.constant 0 : index
    %c0_0 = arith.constant 0 : index
    %c0_1 = arith.constant 0 : index
    %0 = vector.load %arg2[%c0, %c0_0, %c0_1] : memref<1x4x256xf32, #tpu.memory_space<vmem>>, vector<1x4x256xf32>
    %1 = vector.shape_cast %0 : vector<1x4x256xf32> to vector<4x256xf32>
    %cst = arith.constant 0.000000e+00 : f32
    %2 = vector.broadcast %cst : f32 to vector<4x256xf32>
    %3 = tpu.concatenate %1, %2 in 0 : vector<4x256xf32>, vector<4x256xf32> -> vector<8x256xf32>
    %4 = tpu.transpose %3, [1, 0] : vector<8x256xf32> -> vector<256x8xf32>
    %5 = vector.extract_strided_slice %4 {offsets = [0, 0], sizes = [256, 4], strides = [1, 1]} : vector<256x8xf32> to vector<256x4xf32>
    %c0_2 = arith.constant 0 : index
    %c0_3 = arith.constant 0 : index
    %c0_4 = arith.constant 0 : index
    %6 = vector.load %arg3[%c0_2, %c0_3, %c0_4] : memref<1x256x4xf32, #tpu.memory_space<vmem>>, vector<1x256x4xf32>
    %7 = vector.shape_cast %6 : vector<1x256x4xf32> to vector<256x4xf32>
    %8 = vector.shape_cast %5 : vector<256x4xf32> to vector<1x256x4xf32>
    tpu.vector_store %arg3[%c0_2, %c0_3, %c0_4], %8 {strides = array<i32>} : memref<1x256x4xf32, #tpu.memory_space<vmem>>, vector<1x256x4xf32>,
    return
  }
  func.func @transform_0(%arg0: i32, %arg1: i32) -> (i32, i32, i32) {
    %c0_i32 = arith.constant 0 : i32
    %c0_i32_0 = arith.constant 0 : i32
    return %arg0, %c0_i32, %arg1 : i32, i32, i32
  }
  func.func @transform_1(%arg0: i32, %arg1: i32) -> (i32, i32, i32) {
    %c0_i32 = arith.constant 0 : i32
    %c0_i32_0 = arith.constant 0 : i32
    return %arg0, %arg1, %c0_i32 : i32, i32, i32
  }
}

</mosaic_0001>

<llo_original>
// kernel: exchange1.1
$region0: #{exchange1.1}
  #allocation0 [shape = 'u32[]', space=smem, size = 0x4, offset = 0x4, fixed_abs, tag = 'smem constant byte address 0x4 - core index']
  #allocation1 [shape = 'u32[144,128]{1,0:T(1,128)}', space=vmem, size = 0x12000, scoped, tag = 'internal scratch']
  %s0 = inlined_call_operand.vmem [shape: f32[2,4,256], index: 0, kind: input, shape index: {}]
  %s1 = inlined_call_operand.vmem [shape: f32[2,256,4], index: 1, kind: output, shape index: {}]
  %s2 = sld [smem:[#allocation0]]
  $region37: #{exchange1.1} parent=0
    _
  %s4 = ssub.s32 1, %s2
  %s5 = scalar_select 0, %s4, %s2
  loop: start=0, step=1, limit=4
  $region2: #{exchange1.1} parent=0 // loop_pre_header
    _
  $region3: #{exchange1.1} parent=0 // loop_header
    %s7 = sphi 0, %s11
    %p8 = scmp.ge.s32.totalorder %s7, 4
    %s14 = sphi 0, %s26
    %s15 = sphi 0, %s22
    %s16 = sphi 0, %s14
    %s17 = sphi 0, %s15
    %s18 = sphi 0, %s16
    %s19 = sphi 0, %s17
    %s31 = sphi 0, %s33
    %s34 = sphi 0, %s31
    %s35 = sphi 0, %s34
    %s51 = sphi 0, %s35
    %s59 = sphi 0, %s61
    %s62 = sphi 0, %s59
    %s63 = sphi 0, %s62
    %s79 = sphi 0, %s63
  $region4: #{exchange1.1} parent=0 // loop_header_branch
    %10 = sbr.rel (%p8) target = $region8
  $region5: #{exchange1.1} parent=0 // loop_body
    %s12 = ssub.s32 %s7, 1
    %s13 = ssub.s32 %s7, 2
    %s20 = sadd.s32 1, %s15
    %p21 = scmp.ge.s32.totalorder %s20, 1
    %s22 = scalar_select %p21, 0, %s20
    %s23 = sadd.s32 1, %s14
    %s24 = scalar_select %p21, %s23, %s14
    %p25 = scmp.ge.s32.totalorder %s24, 2
    %s26 = scalar_select %p25, 0, %s24
    %s27 = ssub.s32 %s14, %s26
    %s28 = ssub.s32 %s15, %s22
    %s29 = sor.u32 %s27, %s28
    %p30 = scmp.eq.s32.totalorder %s29, 0
    %s32 = sadd.s32 %s31, 1
    %s33 = scalar_select %p30, %s31, %s32
    %p36 = pneg %p30
    %p37 = scmp.eq.s32.totalorder %s7, 1
    %p38 = por %p36, %p37
    %p39 = scmp.ne.s32.totalorder %s31, %s34
    %p40 = scmp.eq.s32.totalorder %s7, 0
    %p41 = por %p39, %p40
    %p42 = scmp.ne.s32.totalorder %s31, %s34
    %p43 = scmp.eq.s32.totalorder %s12, 1
    %p44 = por %p42, %p43
    %p45 = scmp.ne.s32.totalorder %s34, %s35
    %p46 = scmp.eq.s32.totalorder %s12, 0
    %p47 = por %p45, %p46
    %p48 = scmp.ne.s32.totalorder %s34, %s35
    %p49 = scmp.eq.s32.totalorder %s13, 1
    %p50 = por %p48, %p49
    %p52 = scmp.ne.s32.totalorder %s35, %s51
    %p53 = scmp.eq.s32.totalorder %s13, 0
    %p54 = por %p52, %p53
    %s55 = ssub.s32 %s14, %s26
    %s56 = ssub.s32 %s15, %s22
    %s57 = sor.u32 %s55, %s56
    %p58 = scmp.eq.s32.totalorder %s57, 0
    %s60 = sadd.s32 %s59, 1
    %s61 = scalar_select %p58, %s59, %s60
    %p64 = pneg %p58
    %p65 = scmp.eq.s32.totalorder %s7, 1
    %p66 = por %p64, %p65
    %p67 = scmp.ne.s32.totalorder %s59, %s62
    %p68 = scmp.eq.s32.totalorder %s7, 0
    %p69 = por %p67, %p68
    %p70 = scmp.ne.s32.totalorder %s59, %s62
    %p71 = scmp.eq.s32.totalorder %s12, 1
    %p72 = por %p70, %p71
    %p73 = scmp.ne.s32.totalorder %s62, %s63
    %p74 = scmp.eq.s32.totalorder %s12, 0
    %p75 = por %p73, %p74
    %p76 = scmp.ne.s32.totalorder %s62, %s63
    %p77 = scmp.eq.s32.totalorder %s13, 1
    %p78 = por %p76, %p77
    %p80 = scmp.ne.s32.totalorder %s63, %s79
    %p81 = scmp.eq.s32.totalorder %s13, 0
    %p82 = por %p80, %p81
    %p83 = scmp.le.s32.totalorder 1, %s7
    %p84 = scmp.lt.s32.totalorder %s7, 3
    %p85 = pnand %p83, %p84
    %p86 = pneg %p85
    // Predicated region
    $region9: #{exchange1.1} parent=5 // pred_check
      _
    $region10: #{exchange1.1} parent=5 // pred_check_branch
      %88 = sbr.rel (%p85) target = $region12
    $region11: #{exchange1.1} parent=5 // pred_region
      %s89 = ssub.s32 %s7, 1
    $region12: #{exchange1.1} parent=5 // pred_fallthru
      _
    %p90 = scmp.lt.s32.totalorder %s7, 2
    // Predicated region
    $region13: #{exchange1.1} parent=5 // pred_check
      %p91 = pneg %p90
    $region14: #{exchange1.1} parent=5 // pred_check_branch
      %93 = sbr.rel (%p91) target = $region16
    $region15: #{exchange1.1} parent=5 // pred_region
      // Predicated region
      $region17: #{exchange1.1} parent=15 // pred_check
        %p94 = pneg %p41
      $region18: #{exchange1.1} parent=15 // pred_check_branch
        %96 = sbr.rel (%p94) target = $region20
      $region19: #{exchange1.1} parent=15 // pred_region
        %s97 = smul.u32 2, %s15
        %p98 = scmp.lt.s32.totalorder %s14, 1
        %s99 = scalar_select %p98, %s14, 1
        %p100 = scmp.lt.s32.totalorder %s97, 1
        %s101 = scalar_select %p100, %s97, 1
        %s102 = smul.addr %s99, 2
        %s103 = sadd.s32 %s101, %s102
        %s104 = smul.addr %s103, 4
        %s105 = scalar_lea.vmem %s0, %s104
        %s106 = smul.u32 2, %s15
      $region20: #{exchange1.1} parent=15 // pred_fallthru
        _
    $region16: #{exchange1.1} parent=5 // pred_fallthru
      _
    %p107 = scmp.le.s32.totalorder 1, %s7
    %p108 = scmp.lt.s32.totalorder %s7, 3
    %p109 = pnand %p107, %p108
    %p110 = pneg %p109
    // Predicated region
    $region21: #{exchange1.1} parent=5 // pred_check
      _
    $region22: #{exchange1.1} parent=5 // pred_check_branch
      %112 = sbr.rel (%p109) target = $region24
    $region23: #{exchange1.1} parent=5 // pred_region
      %s113 = ssub.s32 %s7, 1
      %s114 = smul.u32 2, %s17
      %p115 = scmp.lt.s32.totalorder %s16, 1
      %s116 = scalar_select %p115, %s16, 1
      %p117 = scmp.lt.s32.totalorder %s114, 1
      %s118 = scalar_select %p117, %s114, 1
      %s119 = smul.addr %s116, 2
      %s120 = sadd.s32 %s118, %s119
      %s121 = smul.addr %s120, 4
      %s122 = scalar_lea.vmem %s0, %s121
      %p123 = pneg %p47
      %p124 = pneg %p44
      %p125 = pneg %p75
      %p126 = pneg %p72
      %s127 = smul.u32 32, %s17
      %p128 = scmp.lt.s32.totalorder %s16, 1
      %s129 = scalar_select %p128, %s16, 1
      %p130 = scmp.lt.s32.totalorder %s127, 31
      %s131 = scalar_select %p130, %s127, 31
      %s132 = smul.addr %s129, 32
      %s133 = sadd.s32 %s131, %s132
      %s134 = smul.addr %s133, 8
      %s135 = scalar_lea.vmem %s1, %s134
      %s136 = smul.u32 2, %s17
      %p137 = scmp.lt.s32.totalorder %s16, 1
      %s138 = scalar_select %p137, %s16, 1
      %p139 = scmp.lt.s32.totalorder %s136, 1
      %s140 = scalar_select %p139, %s136, 1
      %s141 = smul.addr %s138, 2
      %s142 = sadd.s32 %s140, %s141
      %s143 = smul.addr %s142, 4
      %s144 = scalar_lea.vmem %s0, %s143
      %s145 = smul.u32 2, %s17
      %s146 = smul.u32 32, %s17
      %p147 = scmp.lt.s32.totalorder %s16, 1
      %s148 = scalar_select %p147, %s16, 1
      %p149 = scmp.lt.s32.totalorder %s146, 31
      %s150 = scalar_select %p149, %s146, 31
      %s151 = smul.addr %s148, 32
      %s152 = sadd.s32 %s150, %s151
      %s153 = smul.addr %s152, 8
      %s154 = scalar_lea.vmem %s1, %s153
      %s155 = smul.u32 32, %s17
      %v156 = vld [vmem:[%s144] sm:$0xff]
      %v158 = vcombine.high %v156, %v156
      %vm160 = vcmask 1043456
      %v161 = vsel %vm160, %v156, 0.0
      %v162 = vsel %vm160, %v158, 0.0
      %163 = vxpose.xlu0.b32.start [1/16] %v161, 128
      %164 = vxpose.xlu0.b32.cont [2/16] 0.0, 128
      %165 = vxpose.xlu0.b32.cont [3/16] 0.0, 128
      %166 = vxpose.xlu0.b32.cont [4/16] 0.0, 128
      %167 = vxpose.xlu0.b32.cont [5/16] 0.0, 128
      %168 = vxpose.xlu0.b32.cont [6/16] 0.0, 128
      %169 = vxpose.xlu0.b32.cont [7/16] 0.0, 128
      %170 = vxpose.xlu0.b32.cont [8/16] 0.0, 128
      %171 = vxpose.xlu0.b32.cont [9/16] 0.0, 128
      %172 = vxpose.xlu0.b32.cont [10/16] 0.0, 128
      %173 = vxpose.xlu0.b32.cont [11/16] 0.0, 128
      %174 = vxpose.xlu0.b32.cont [12/16] 0.0, 128
      %175 = vxpose.xlu0.b32.cont [13/16] 0.0, 128
      %176 = vxpose.xlu0.b32.cont [14/16] 0.0, 128
      %177 = vxpose.xlu0.b32.cont [15/16] 0.0, 128
      %178 = vxpose.xlu0.b32.end [16/16] 0.0, 128
      %v179 = vpop.trf.xlu0
      %v180 = vpop.trf.xlu0
      %v181 = vpop.trf.xlu0
      %v182 = vpop.trf.xlu0
      %v183 = vpop.trf.xlu0
      %v184 = vpop.trf.xlu0
      %v185 = vpop.trf.xlu0
      %v186 = vpop.trf.xlu0
      %v187 = vpop.trf.xlu0
      %v188 = vpop.trf.xlu0
      %v189 = vpop.trf.xlu0
      %v190 = vpop.trf.xlu0
      %v191 = vpop.trf.xlu0
      %v192 = vpop.trf.xlu0
      %v193 = vpop.trf.xlu0
      %v194 = vpop.trf.xlu0
      %195 = vxpose.xlu0.b32.start [1/16] %v162, 128
      %196 = vxpose.xlu0.b32.cont [2/16] 0.0, 128
      %197 = vxpose.xlu0.b32.cont [3/16] 0.0, 128
      %198 = vxpose.xlu0.b32.cont [4/16] 0.0, 128
      %199 = vxpose.xlu0.b32.cont [5/16] 0.0, 128
      %200 = vxpose.xlu0.b32.cont [6/16] 0.0, 128
      %201 = vxpose.xlu0.b32.cont [7/16] 0.0, 128
      %202 = vxpose.xlu0.b32.cont [8/16] 0.0, 128
      %203 = vxpose.xlu0.b32.cont [9/16] 0.0, 128
      %204 = vxpose.xlu0.b32.cont [10/16] 0.0, 128
      %205 = vxpose.xlu0.b32.cont [11/16] 0.0, 128
      %206 = vxpose.xlu0.b32.cont [12/16] 0.0, 128
      %207 = vxpose.xlu0.b32.cont [13/16] 0.0, 128
      %208 = vxpose.xlu0.b32.cont [14/16] 0.0, 128
      %209 = vxpose.xlu0.b32.cont [15/16] 0.0, 128
      %210 = vxpose.xlu0.b32.end [16/16] 0.0, 128
      %v211 = vpop.trf.xlu0
      %v212 = vpop.trf.xlu0
      %v213 = vpop.trf.xlu0
      %v214 = vpop.trf.xlu0
      %v215 = vpop.trf.xlu0
      %v216 = vpop.trf.xlu0
      %v217 = vpop.trf.xlu0
      %v218 = vpop.trf.xlu0
      %v219 = vpop.trf.xlu0
      %v220 = vpop.trf.xlu0
      %v221 = vpop.trf.xlu0
      %v222 = vpop.trf.xlu0
      %v223 = vpop.trf.xlu0
      %v224 = vpop.trf.xlu0
      %v225 = vpop.trf.xlu0
      %v226 = vpop.trf.xlu0
      %vm227 = vcmask 31744
      %228 = vst.msk [vmem:[%s154] sm:$0xff] %vm227, %v179
      %229 = vst.msk [vmem:[%s154 + $0x8] sm:$0xff] %vm227, %v180
      %230 = vst.msk [vmem:[%s154 + $0x10] sm:$0xff] %vm227, %v181
      %231 = vst.msk [vmem:[%s154 + $0x18] sm:$0xff] %vm227, %v182
      %232 = vst.msk [vmem:[%s154 + $0x20] sm:$0xff] %vm227, %v183
      %233 = vst.msk [vmem:[%s154 + $0x28] sm:$0xff] %vm227, %v184
      %234 = vst.msk [vmem:[%s154 + $0x30] sm:$0xff] %vm227, %v185
      %235 = vst.msk [vmem:[%s154 + $0x38] sm:$0xff] %vm227, %v186
      %236 = vst.msk [vmem:[%s154 + $0x40] sm:$0xff] %vm227, %v187
      %237 = vst.msk [vmem:[%s154 + $0x48] sm:$0xff] %vm227, %v188
      %238 = vst.msk [vmem:[%s154 + $0x50] sm:$0xff] %vm227, %v189
      %239 = vst.msk [vmem:[%s154 + $0x58] sm:$0xff] %vm227, %v190
      %240 = vst.msk [vmem:[%s154 + $0x60] sm:$0xff] %vm227, %v191
      %241 = vst.msk [vmem:[%s154 + $0x68] sm:$0xff] %vm227, %v192
      %242 = vst.msk [vmem:[%s154 + $0x70] sm:$0xff] %vm227, %v193
      %243 = vst.msk [vmem:[%s154 + $0x78] sm:$0xff] %vm227, %v194
      %244 = vst.msk [vmem:[%s154 + $0x80] sm:$0xff] %vm227, %v211
      %245 = vst.msk [vmem:[%s154 + $0x88] sm:$0xff] %vm227, %v212
      %246 = vst.msk [vmem:[%s154 + $0x90] sm:$0xff] %vm227, %v213
      %247 = vst.msk [vmem:[%s154 + $0x98] sm:$0xff] %vm227, %v214
      %248 = vst.msk [vmem:[%s154 + $0xa0] sm:$0xff] %vm227, %v215
      %249 = vst.msk [vmem:[%s154 + $0xa8] sm:$0xff] %vm227, %v216
      %250 = vst.msk [vmem:[%s154 + $0xb0] sm:$0xff] %vm227, %v217
      %251 = vst.msk [vmem:[%s154 + $0xb8] sm:$0xff] %vm227, %v218
      %252 = vst.msk [vmem:[%s154 + $0xc0] sm:$0xff] %vm227, %v219
      %253 = vst.msk [vmem:[%s154 + $0xc8] sm:$0xff] %vm227, %v220
      %254 = vst.msk [vmem:[%s154 + $0xd0] sm:$0xff] %vm227, %v221
      %255 = vst.msk [vmem:[%s154 + $0xd8] sm:$0xff] %vm227, %v222
      %256 = vst.msk [vmem:[%s154 + $0xe0] sm:$0xff] %vm227, %v223
      %257 = vst.msk [vmem:[%s154 + $0xe8] sm:$0xff] %vm227, %v224
      %258 = vst.msk [vmem:[%s154 + $0xf0] sm:$0xff] %vm227, %v225
      %259 = vst.msk [vmem:[%s154 + $0xf8] sm:$0xff] %vm227, %v226
      %s260 = smul.u32 32, %s17
      %p261 = scmp.lt.s32.totalorder %s16, 1
      %s262 = scalar_select %p261, %s16, 1
      %p263 = scmp.lt.s32.totalorder %s260, 31
      %s264 = scalar_select %p263, %s260, 31
      %s265 = smul.addr %s262, 32
      %s266 = sadd.s32 %s264, %s265
      %s267 = smul.addr %s266, 8
      %s268 = scalar_lea.vmem %s1, %s267
      // Predicated region
      $region25: #{exchange1.1} parent=23 // pred_check
        %p269 = pneg %p72
      $region26: #{exchange1.1} parent=23 // pred_check_branch
        %271 = sbr.rel (%p269) target = $region28
      $region27: #{exchange1.1} parent=23 // pred_region
        %s272 = smul.u32 32, %s17
      $region28: #{exchange1.1} parent=23 // pred_fallthru
        _
    $region24: #{exchange1.1} parent=5 // pred_fallthru
      _
    %p273 = scmp.le.s32.totalorder 2, %s7
    // Predicated region
    $region29: #{exchange1.1} parent=5 // pred_check
      %p274 = pneg %p273
    $region30: #{exchange1.1} parent=5 // pred_check_branch
      %276 = sbr.rel (%p274) target = $region32
    $region31: #{exchange1.1} parent=5 // pred_region
      %s277 = ssub.s32 %s7, 2
      // Predicated region
      $region33: #{exchange1.1} parent=31 // pred_check
        %p278 = pneg %p78
      $region34: #{exchange1.1} parent=31 // pred_check_branch
        %280 = sbr.rel (%p278) target = $region36
      $region35: #{exchange1.1} parent=31 // pred_region
        %s281 = smul.u32 32, %s19
        %p282 = scmp.lt.s32.totalorder %s18, 1
        %s283 = scalar_select %p282, %s18, 1
        %p284 = scmp.lt.s32.totalorder %s281, 31
        %s285 = scalar_select %p284, %s281, 31
        %s286 = smul.addr %s283, 32
        %s287 = sadd.s32 %s285, %s286
        %s288 = smul.addr %s287, 8
        %s289 = scalar_lea.vmem %s1, %s288
      $region36: #{exchange1.1} parent=31 // pred_fallthru
        _
    $region32: #{exchange1.1} parent=5 // pred_fallthru
      _
  $region6: #{exchange1.1} parent=0 // loop_footer
    %s11 = sadd.s32 1, %s7
  $region7: #{exchange1.1} parent=0 // loop_footer_branch
    %6 = sbr.rel target = $region3
  $region8: #{exchange1.1} parent=0 // loop_exit
    _

</llo_original>
